<compile_context>
chip_gen: v6e
topology: v6e:2x2x1
jax: 0.10.0
libtpu: 0.0.40
codegen_flags: <defaults>
</compile_context>

<pallas_src>
import jax
import jax.numpy as jnp
from jax import lax
from jax.experimental import pallas as pl
from jax.experimental.pallas import tpu as pltpu


def _convt1x1_where_kernel(x_ref, w_ref, o_ref):
    # x_ref: (Nb, Cin, HW)   w_ref: (Cin, Cout)   o_ref: (Nb, Cout, HW)
    w = w_ref[...]
    nb = x_ref.shape[0]
    for n in range(nb):  # Nb is small & static -> unrolled at trace time
        # Contract Cin (axis 0 of w, axis 0 of x[n]) -> (Cout, HW) on the MXU.
        v1 = lax.dot_general(
            w,
            x_ref[n],
            dimension_numbers=(((0,), (0,)), ((), ())),
            preferred_element_type=jnp.float32,
        )
        # v2 = v1 > 0 ; v3 = v1 * 1.06 ; v4 = where(v2, v1, v3)
        # (1.06 matches the PyTorch module's constant — not a leaky-ReLU 0.06.)
        o_ref[n] = jnp.where(v1 > 0, v1, v1 * 1.06).astype(o_ref.dtype)


def convt1x1_where(x_nchw, weight):
    """ConvTranspose2d(Cin, Cout, 1, stride=1, pad=0, bias=False) fused with
    where(v1 > 0, v1, v1 * 1.06).

    x_nchw: (N, Cin, H, W) float32
    weight: (Cin, Cout, 1, 1) float32   (PyTorch ConvTranspose2d layout)
    returns: (N, Cout, H, W) float32
    """
    N, Cin, H, W = x_nchw.shape
    Cout = weight.shape[1]
    HW = H * W

    w2d = weight.reshape(Cin, Cout)        # 1x1 kernel -> plain matrix
    x3 = x_nchw.reshape(N, Cin, HW)        # free reshape (no HBM transpose)

    # Two batch-blocks when possible: megacore-shards on v7x, negligible extra
    # per-step overhead on single-TC v5e/v6e.
    G = 2 if (N % 2 == 0 and N >= 2) else 1
    Nb = N // G

    out3 = pl.pallas_call(
        _convt1x1_where_kernel,
        out_shape=jax.ShapeDtypeStruct((N, Cout, HW), jnp.float32),
        grid=(G,),
        in_specs=[
            # Last two block dims equal the full array dims -> no (8,128) issues.
            pl.BlockSpec((Nb, Cin, HW), lambda g: (g, 0, 0)),
            pl.BlockSpec((Cin, Cout), lambda g: (0, 0)),   # weight resident
        ],
        out_specs=pl.BlockSpec((Nb, Cout, HW), lambda g: (g, 0, 0)),
        compiler_params=pltpu.CompilerParams(
            dimension_semantics=("parallel",),
        ),
        cost_estimate=pl.CostEstimate(
            flops=2 * N * Cout * HW * Cin,
            bytes_accessed=4 * (N * Cin * HW + Cin * Cout + N * Cout * HW),
            transcendentals=0,
        ),
    )(x3, w2d)

    return out3.reshape(N, Cout, H, W)     # free reshape back to NCHW


if __name__ == "__main__":
    key = jax.random.PRNGKey(0)
    k_x, k_w = jax.random.split(key)

    # Small-batch version of the module's input (10, 148, 12, 8) -> batch=2.
    N, Cin, H, W = 2, 148, 12, 8
    Cout = 29

    x = jax.random.normal(k_x, (N, Cin, H, W), dtype=jnp.float32)
    # Deterministic weight init (uniform, matching ConvTranspose2d weight shape).
    bound = 1.0 / (Cin ** 0.5)
    weight = jax.random.uniform(
        k_w, (Cin, Cout, 1, 1), dtype=jnp.float32, minval=-bound, maxval=bound
    )

    out = convt1x1_where(x, weight)
    jax.block_until_ready(out)

    # Pure-JAX reference of the fused semantics (same default matmul precision).
    v1_ref = jnp.einsum("nihw,io->nohw", x, weight.reshape(Cin, Cout))
    ref = jnp.where(v1_ref > 0, v1_ref, v1_ref * 1.06)
    assert out.shape == (N, Cout, H, W)
    assert jnp.allclose(out, ref, atol=1e-4, rtol=1e-4), float(
        jnp.max(jnp.abs(out - ref))
    )

    print("KERNEL_OK")
</pallas_src>

<mosaic_0001>
module attributes {stable_mosaic.version = 11 : i64} {
  func.func @_convt1x1_where_kernel(%arg0: i32, %arg1: memref<1x148x96xf32, #tpu.memory_space<vmem>>, %arg2: memref<148x29xf32, #tpu.memory_space<vmem>>, %arg3: memref<1x29x96xf32, #tpu.memory_space<vmem>>) attributes {dimension_semantics = [#tpu.dimension_semantics<parallel>], iteration_bounds = array<i64: 2>, scalar_prefetch = 0 : i64, scratch_operands = 0 : i64, tpu.core_type = #tpu.core_type<tc>, window_params = [{transform_indices = @transform_0, window_bounds = array<i64: 1, 148, 96>}, {pipeline_mode = #tpu.pipeline_mode<synchronous>, transform_indices = @transform_1, window_bounds = array<i64: 148, 29>}, {transform_indices = @transform_2, window_bounds = array<i64: 1, 29, 96>}]} {
    %c0 = arith.constant 0 : index
    %c0_0 = arith.constant 0 : index
    %0 = vector.load %arg2[%c0, %c0_0] : memref<148x29xf32, #tpu.memory_space<vmem>>, vector<148x29xf32>
    %c0_1 = arith.constant 0 : index
    %c0_2 = arith.constant 0 : index
    %c0_3 = arith.constant 0 : index
    %1 = vector.load %arg1[%c0_1, %c0_2, %c0_3] : memref<1x148x96xf32, #tpu.memory_space<vmem>>, vector<1x148x96xf32>
    %2 = vector.shape_cast %1 : vector<1x148x96xf32> to vector<148x96xf32>
    %cst = arith.constant dense<0.000000e+00> : vector<29x96xf32>
    %3 = tpu.matmul %0, %2, %cst {dimension_numbers = #tpu.dot_dimension_numbers<[0], [0], [1], [1], [0, 1, 1, 1], [], []>} : vector<148x29xf32>, vector<148x96xf32>, vector<29x96xf32> -> vector<29x96xf32>
    %cst_4 = arith.constant 0.000000e+00 : f32
    %4 = vector.broadcast %cst_4 : f32 to vector<29x96xf32>
    %5 = arith.cmpf ogt, %3, %4 : vector<29x96xf32>
    %cst_5 = arith.constant 1.060000e+00 : f32
    %6 = vector.broadcast %cst_5 : f32 to vector<29x96xf32>
    %7 = arith.mulf %3, %6 : vector<29x96xf32>
    %8 = arith.select %5, %3, %7 : vector<29x96xi1>, vector<29x96xf32>
    %c0_6 = arith.constant 0 : index
    %c0_7 = arith.constant 0 : index
    %c0_8 = arith.constant 0 : index
    %9 = vector.load %arg3[%c0_6, %c0_7, %c0_8] : memref<1x29x96xf32, #tpu.memory_space<vmem>>, vector<1x29x96xf32>
    %10 = vector.shape_cast %9 : vector<1x29x96xf32> to vector<29x96xf32>
    %11 = vector.shape_cast %8 : vector<29x96xf32> to vector<1x29x96xf32>
    tpu.vector_store %arg3[%c0_6, %c0_7, %c0_8], %11 {strides = array<i32>} : memref<1x29x96xf32, #tpu.memory_space<vmem>>, vector<1x29x96xf32>,
    return
  }
  func.func @transform_0(%arg0: i32) -> (i32, i32, i32) {
    %c0_i32 = arith.constant 0 : i32
    %c0_i32_0 = arith.constant 0 : i32
    %c0_i32_1 = arith.constant 0 : i32
    return %arg0, %c0_i32, %c0_i32_0 : i32, i32, i32
  }
  func.func @transform_1(%arg0: i32) -> (i32, i32) {
    %c0_i32 = arith.constant 0 : i32
    %c0_i32_0 = arith.constant 0 : i32
    %c0_i32_1 = arith.constant 0 : i32
    return %c0_i32, %c0_i32_0 : i32, i32
  }
  func.func @transform_2(%arg0: i32) -> (i32, i32, i32) {
    %c0_i32 = arith.constant 0 : i32
    %c0_i32_0 = arith.constant 0 : i32
    %c0_i32_1 = arith.constant 0 : i32
    return %arg0, %c0_i32, %c0_i32_0 : i32, i32, i32
  }
}

</mosaic_0001>

<llo_original>
// kernel: tpu_custom_call.1
$region0: #{tpu_custom_call.1}
  #allocation0 [shape = 'u32[]', space=smem, size = 0x4, offset = 0x4, fixed_abs, tag = 'smem constant byte address 0x4 - core index']
  #allocation1 [shape = 'u32[144,128]{1,0:T(1,128)}', space=vmem, size = 0x12000, scoped, tag = 'internal scratch']
  %s0 = inlined_call_operand.vmem [shape: f32[2,148,96], index: 0, kind: input, shape index: {}]
  %s1 = inlined_call_operand.vmem [shape: f32[148,29], index: 1, kind: input, shape index: {}]
  %s2 = inlined_call_operand.vmem [shape: f32[2,29,96], index: 2, kind: output, shape index: {}]
  %s3 = sld [smem:[#allocation0]]
  $region41: #{tpu_custom_call.1} parent=0
    _
  %s5 = ssub.s32 1, %s3
  %s6 = scalar_select 0, %s5, %s3
  loop: start=0, step=1, limit=4
  $region2: #{tpu_custom_call.1} parent=0 // loop_pre_header
    _
  $region3: #{tpu_custom_call.1} parent=0 // loop_header
    %s8 = sphi 0, %s12
    %p9 = scmp.ge.s32.totalorder %s8, 4
    %s18 = sphi 0, %s20
    %s21 = sphi 0, %s18
    %s22 = sphi 0, %s21
    %s38 = sphi 0, %s22
    %s42 = sphi 0, %s42
    %s44 = sphi 0, %s42
    %s45 = sphi 0, %s44
    %s59 = sphi 0, %s45
    %s65 = sphi 0, %s67
    %s68 = sphi 0, %s65
    %s69 = sphi 0, %s68
    %s85 = sphi 0, %s69
  $region4: #{tpu_custom_call.1} parent=0 // loop_header_branch
    %11 = sbr.rel (%p9) target = $region8
  $region5: #{tpu_custom_call.1} parent=0 // loop_body
    %s13 = ssub.s32 %s8, 1
    %s14 = ssub.s32 %s8, 2
    %s15 = sadd.s32 %s8, 1
    %s16 = ssub.s32 %s8, %s15
    %p17 = scmp.eq.s32.totalorder %s16, 0
    %s19 = sadd.s32 %s18, 1
    %s20 = scalar_select %p17, %s18, %s19
    %p23 = pneg %p17
    %p24 = scmp.eq.s32.totalorder %s8, 1
    %p25 = por %p23, %p24
    %p26 = scmp.ne.s32.totalorder %s18, %s21
    %p27 = scmp.eq.s32.totalorder %s8, 0
    %p28 = por %p26, %p27
    %p29 = scmp.ne.s32.totalorder %s18, %s21
    %p30 = scmp.eq.s32.totalorder %s13, 1
    %p31 = por %p29, %p30
    %p32 = scmp.ne.s32.totalorder %s21, %s22
    %p33 = scmp.eq.s32.totalorder %s13, 0
    %p34 = por %p32, %p33
    %p35 = scmp.ne.s32.totalorder %s21, %s22
    %p36 = scmp.eq.s32.totalorder %s14, 1
    %p37 = por %p35, %p36
    %p39 = scmp.ne.s32.totalorder %s22, %s38
    %p40 = scmp.eq.s32.totalorder %s14, 0
    %p41 = por %p39, %p40
    %s43 = sadd.s32 %s42, 1
    %p46 = scmp.eq.s32.totalorder %s8, 1
    %p47 = scmp.ne.s32.totalorder %s42, %s44
    %p48 = scmp.eq.s32.totalorder %s8, 0
    %p49 = por %p47, %p48
    %p50 = scmp.ne.s32.totalorder %s42, %s44
    %p51 = scmp.eq.s32.totalorder %s13, 1
    %p52 = por %p50, %p51
    %p53 = scmp.ne.s32.totalorder %s44, %s45
    %p54 = scmp.eq.s32.totalorder %s13, 0
    %p55 = por %p53, %p54
    %p56 = scmp.ne.s32.totalorder %s44, %s45
    %p57 = scmp.eq.s32.totalorder %s14, 1
    %p58 = por %p56, %p57
    %p60 = scmp.ne.s32.totalorder %s45, %s59
    %p61 = scmp.eq.s32.totalorder %s14, 0
    %p62 = por %p60, %p61
    %s63 = ssub.s32 %s8, %s15
    %p64 = scmp.eq.s32.totalorder %s63, 0
    %s66 = sadd.s32 %s65, 1
    %s67 = scalar_select %p64, %s65, %s66
    %p70 = pneg %p64
    %p71 = scmp.eq.s32.totalorder %s8, 1
    %p72 = por %p70, %p71
    %p73 = scmp.ne.s32.totalorder %s65, %s68
    %p74 = scmp.eq.s32.totalorder %s8, 0
    %p75 = por %p73, %p74
    %p76 = scmp.ne.s32.totalorder %s65, %s68
    %p77 = scmp.eq.s32.totalorder %s13, 1
    %p78 = por %p76, %p77
    %p79 = scmp.ne.s32.totalorder %s68, %s69
    %p80 = scmp.eq.s32.totalorder %s13, 0
    %p81 = por %p79, %p80
    %p82 = scmp.ne.s32.totalorder %s68, %s69
    %p83 = scmp.eq.s32.totalorder %s14, 1
    %p84 = por %p82, %p83
    %p86 = scmp.ne.s32.totalorder %s69, %s85
    %p87 = scmp.eq.s32.totalorder %s14, 0
    %p88 = por %p86, %p87
    %p89 = scmp.le.s32.totalorder 1, %s8
    %p90 = scmp.lt.s32.totalorder %s8, 3
    %p91 = pnand %p89, %p90
    %p92 = pneg %p91
    // Predicated region
    $region9: #{tpu_custom_call.1} parent=5 // pred_check
      _
    $region10: #{tpu_custom_call.1} parent=5 // pred_check_branch
      %94 = sbr.rel (%p91) target = $region12
    $region11: #{tpu_custom_call.1} parent=5 // pred_region
      %s95 = ssub.s32 %s8, 1
      // Predicated region
      $region13: #{tpu_custom_call.1} parent=11 // pred_check
        %p96 = pneg %p55
      $region14: #{tpu_custom_call.1} parent=11 // pred_check_branch
        %98 = sbr.rel (%p96) target = $region16
      $region15: #{tpu_custom_call.1} parent=11 // pred_region
        _
      $region16: #{tpu_custom_call.1} parent=11 // pred_fallthru
        _
    $region12: #{tpu_custom_call.1} parent=5 // pred_fallthru
      _
    %p99 = scmp.lt.s32.totalorder %s8, 2
    // Predicated region
    $region17: #{tpu_custom_call.1} parent=5 // pred_check
      %p100 = pneg %p99
    $region18: #{tpu_custom_call.1} parent=5 // pred_check_branch
      %102 = sbr.rel (%p100) target = $region20
    $region19: #{tpu_custom_call.1} parent=5 // pred_region
      // Predicated region
      $region21: #{tpu_custom_call.1} parent=19 // pred_check
        %p103 = pneg %p28
      $region22: #{tpu_custom_call.1} parent=19 // pred_check_branch
        %105 = sbr.rel (%p103) target = $region24
      $region23: #{tpu_custom_call.1} parent=19 // pred_region
        %p106 = scmp.lt.s32.totalorder %s8, 1
        %s107 = scalar_select %p106, %s8, 1
        %s108 = smul.addr %s107, 19
        %s109 = smul.addr %s108, 8
        %s110 = scalar_lea.vmem %s0, %s109
      $region24: #{tpu_custom_call.1} parent=19 // pred_fallthru
        _
    $region20: #{tpu_custom_call.1} parent=5 // pred_fallthru
      _
    %p111 = scmp.le.s32.totalorder 1, %s8
    %p112 = scmp.lt.s32.totalorder %s8, 3
    %p113 = pnand %p111, %p112
    %p114 = pneg %p113
    // Predicated region
    $region25: #{tpu_custom_call.1} parent=5 // pred_check
      _
    $region26: #{tpu_custom_call.1} parent=5 // pred_check_branch
      %116 = sbr.rel (%p113) target = $region28
    $region27: #{tpu_custom_call.1} parent=5 // pred_region
      %s117 = ssub.s32 %s8, 1
      %p118 = scmp.lt.s32.totalorder %s13, 1
      %s119 = scalar_select %p118, %s13, 1
      %s120 = smul.addr %s119, 19
      %s121 = smul.addr %s120, 8
      %s122 = scalar_lea.vmem %s0, %s121
      %p123 = pneg %p34
      %p124 = pneg %p31
      %p125 = pneg %p55
      %p126 = pneg %p52
      %p127 = pneg %p81
      %p128 = pneg %p78
      %p129 = scmp.lt.s32.totalorder %s13, 1
      %s130 = scalar_select %p129, %s13, 1
      %s131 = smul.addr %s130, 4
      %s132 = smul.addr %s131, 8
      %s133 = scalar_lea.vmem %s2, %s132
      %p134 = scmp.lt.s32.totalorder %s13, 1
      %s135 = scalar_select %p134, %s13, 1
      %s136 = smul.addr %s135, 19
      %s137 = smul.addr %s136, 8
      %s138 = scalar_lea.vmem %s0, %s137
      %p139 = scmp.lt.s32.totalorder %s13, 1
      %s140 = scalar_select %p139, %s13, 1
      %s141 = smul.addr %s140, 4
      %s142 = smul.addr %s141, 8
      %s143 = scalar_lea.vmem %s2, %s142
      %v144 = vld [vmem:[%s1] sm:$0xff]
      %v145 = vld [vmem:[%s1 + $0x8] sm:$0xff]
      %v146 = vld [vmem:[%s1 + $0x10] sm:$0xff]
      %v147 = vld [vmem:[%s1 + $0x18] sm:$0xff]
      %v148 = vld [vmem:[%s1 + $0x20] sm:$0xff]
      %v149 = vld [vmem:[%s1 + $0x28] sm:$0xff]
      %v150 = vld [vmem:[%s1 + $0x30] sm:$0xff]
      %v151 = vld [vmem:[%s1 + $0x38] sm:$0xff]
      %v152 = vld [vmem:[%s1 + $0x40] sm:$0xff]
      %v153 = vld [vmem:[%s1 + $0x48] sm:$0xff]
      %v154 = vld [vmem:[%s1 + $0x50] sm:$0xff]
      %v155 = vld [vmem:[%s1 + $0x58] sm:$0xff]
      %v156 = vld [vmem:[%s1 + $0x60] sm:$0xff]
      %v157 = vld [vmem:[%s1 + $0x68] sm:$0xff]
      %v158 = vld [vmem:[%s1 + $0x70] sm:$0xff]
      %v159 = vld [vmem:[%s1 + $0x78] sm:$0xff]
      %v160 = vld [vmem:[%s1 + $0x80] sm:$0xff]
      %v161 = vld [vmem:[%s1 + $0x88] sm:$0xff]
      %v162 = vld [vmem:[%s1 + $0x90] sm:$0xf]
      %v163 = vld [vmem:[%s138] sm:$0xff]
      %v164 = vld [vmem:[%s138 + $0x8] sm:$0xff]
      %v165 = vld [vmem:[%s138 + $0x10] sm:$0xff]
      %v166 = vld [vmem:[%s138 + $0x18] sm:$0xff]
      %v167 = vld [vmem:[%s138 + $0x20] sm:$0xff]
      %v168 = vld [vmem:[%s138 + $0x28] sm:$0xff]
      %v169 = vld [vmem:[%s138 + $0x30] sm:$0xff]
      %v170 = vld [vmem:[%s138 + $0x38] sm:$0xff]
      %v171 = vld [vmem:[%s138 + $0x40] sm:$0xff]
      %v172 = vld [vmem:[%s138 + $0x48] sm:$0xff]
      %v173 = vld [vmem:[%s138 + $0x50] sm:$0xff]
      %v174 = vld [vmem:[%s138 + $0x58] sm:$0xff]
      %v175 = vld [vmem:[%s138 + $0x60] sm:$0xff]
      %v176 = vld [vmem:[%s138 + $0x68] sm:$0xff]
      %v177 = vld [vmem:[%s138 + $0x70] sm:$0xff]
      %v178 = vld [vmem:[%s138 + $0x78] sm:$0xff]
      %v179 = vld [vmem:[%s138 + $0x80] sm:$0xff]
      %v180 = vld [vmem:[%s138 + $0x88] sm:$0xff]
      %v181 = vld [vmem:[%s138 + $0x90] sm:$0xf]
      %182 = vxpose.xlu0.b32.start [1/16] %v144, 128
      %183 = vxpose.xlu0.b32.cont [2/16] %v145, 128
      %184 = vxpose.xlu0.b32.cont [3/16] %v146, 128
      %185 = vxpose.xlu0.b32.cont [4/16] %v147, 128
      %186 = vxpose.xlu0.b32.cont [5/16] %v148, 128
      %187 = vxpose.xlu0.b32.cont [6/16] %v149, 128
      %188 = vxpose.xlu0.b32.cont [7/16] %v150, 128
      %189 = vxpose.xlu0.b32.cont [8/16] %v151, 128
      %190 = vxpose.xlu0.b32.cont [9/16] %v152, 128
      %191 = vxpose.xlu0.b32.cont [10/16] %v153, 128
      %192 = vxpose.xlu0.b32.cont [11/16] %v154, 128
      %193 = vxpose.xlu0.b32.cont [12/16] %v155, 128
      %194 = vxpose.xlu0.b32.cont [13/16] %v156, 128
      %195 = vxpose.xlu0.b32.cont [14/16] %v157, 128
      %196 = vxpose.xlu0.b32.cont [15/16] %v158, 128
      %197 = vxpose.xlu0.b32.end [16/16] %v159, 128
      %v198 = vpop.trf.xlu0
      %v199 = vpop.trf.xlu0
      %v200 = vpop.trf.xlu0
      %v201 = vpop.trf.xlu0
      %v202 = vpop.trf.xlu0
      %v203 = vpop.trf.xlu0
      %v204 = vpop.trf.xlu0
      %v205 = vpop.trf.xlu0
      %v206 = vpop.trf.xlu0
      %v207 = vpop.trf.xlu0
      %v208 = vpop.trf.xlu0
      %v209 = vpop.trf.xlu0
      %v210 = vpop.trf.xlu0
      %v211 = vpop.trf.xlu0
      %v212 = vpop.trf.xlu0
      %v213 = vpop.trf.xlu0
      %214 = vxpose.xlu0.b32.start [1/16] %v160, 128
      %215 = vxpose.xlu0.b32.cont [2/16] %v161, 128
      %216 = vxpose.xlu0.b32.cont [3/16] %v162, 128
      %217 = vxpose.xlu0.b32.cont [4/16] 0.0, 128
      %218 = vxpose.xlu0.b32.cont [5/16] 0.0, 128
      %219 = vxpose.xlu0.b32.cont [6/16] 0.0, 128
      %220 = vxpose.xlu0.b32.cont [7/16] 0.0, 128
      %221 = vxpose.xlu0.b32.cont [8/16] 0.0, 128
      %222 = vxpose.xlu0.b32.cont [9/16] 0.0, 128
      %223 = vxpose.xlu0.b32.cont [10/16] 0.0, 128
      %224 = vxpose.xlu0.b32.cont [11/16] 0.0, 128
      %225 = vxpose.xlu0.b32.cont [12/16] 0.0, 128
      %226 = vxpose.xlu0.b32.cont [13/16] 0.0, 128
      %227 = vxpose.xlu0.b32.cont [14/16] 0.0, 128
      %228 = vxpose.xlu0.b32.cont [15/16] 0.0, 128
      %229 = vxpose.xlu0.b32.end [16/16] 0.0, 128
      %v230 = vpop.trf.xlu0
      %v231 = vpop.trf.xlu0
      %v232 = vpop.trf.xlu0
      %v233 = vpop.trf.xlu0
      %v234 = vpop.trf.xlu0
      %v235 = vpop.trf.xlu0
      %v236 = vpop.trf.xlu0
      %v237 = vpop.trf.xlu0
      %v238 = vpop.trf.xlu0
      %v239 = vpop.trf.xlu0
      %v240 = vpop.trf.xlu0
      %v241 = vpop.trf.xlu0
      %v242 = vpop.trf.xlu0
      %v243 = vpop.trf.xlu0
      %v244 = vpop.trf.xlu0
      %v245 = vpop.trf.xlu0
      %vm246 = vcmask 162816
      %v248 = vsel %vm246, %v230, 0
      %v251 = vsel %vm246, %v231, 0
      %v254 = vsel %vm246, %v232, 0
      %v257 = vsel %vm246, %v233, 0
      %vm259 = vcmask 1043456
      %v261 = vsel %vm259, %v181, 0
      %263 = vmatprep.subr.mxu0 0.0
      %264 = vmatpush1.msra.mxu0 %v178
      %265 = vmatprep.subr.mxu0 0.0
      %266 = vmatpush1.msra.mxu0 %v177
      %267 = vmatprep.subr.mxu0 0.0
      %268 = vmatpush1.msra.mxu0 %v176
      %269 = vmatprep.subr.mxu0 0.0
      %270 = vmatpush1.msra.mxu0 %v175
      %271 = vmatprep.subr.mxu0 0.0
      %272 = vmatpush1.msra.mxu0 %v174
      %273 = vmatprep.subr.mxu0 0.0
      %274 = vmatpush1.msra.mxu0 %v173
      %275 = vmatprep.subr.mxu0 0.0
      %276 = vmatpush1.msra.mxu0 %v172
      %277 = vmatprep.subr.mxu0 0.0
      %278 = vmatpush1.msra.mxu0 %v171
      %279 = vmatprep.subr.mxu0 0.0
      %280 = vmatpush1.msra.mxu0 %v170
      %281 = vmatprep.subr.mxu0 0.0
      %282 = vmatpush1.msra.mxu0 %v169
      %283 = vmatprep.subr.mxu0 0.0
      %284 = vmatpush1.msra.mxu0 %v168
      %285 = vmatprep.subr.mxu0 0.0
      %286 = vmatpush1.msra.mxu0 %v167
      %287 = vmatprep.subr.mxu0 0.0
      %288 = vmatpush1.msra.mxu0 %v166
      %289 = vmatprep.subr.mxu0 0.0
      %290 = vmatpush1.msra.mxu0 %v165
      %291 = vmatprep.subr.mxu0 0.0
      %292 = vmatpush1.msra.mxu0 %v164
      %293 = vmatprep.subr.mxu0 0.0
      %294 = vmatpush1.msra.mxu0 %v163
      %295 = vmatprep.subr.mxu0 0.0
      %296 = vmatpush2.msra.mxu0 0.0
      %297 = vmatprep.subr.mxu0 0.0
      %298 = vmatpush2.msra.mxu0 0.0
      %299 = vmatprep.subr.mxu0 0.0
      %300 = vmatpush2.msra.mxu0 0.0
      %301 = vmatprep.subr.mxu0 0.0
      %302 = vmatpush2.msra.mxu0 0.0
      %303 = vmatprep.subr.mxu0 0.0
      %304 = vmatpush2.msra.mxu0 0.0
      %305 = vmatprep.subr.mxu0 0.0
      %306 = vmatpush2.msra.mxu0 0.0
      %307 = vmatprep.subr.mxu0 0.0
      %308 = vmatpush2.msra.mxu0 0.0
      %309 = vmatprep.subr.mxu0 0.0
      %310 = vmatpush2.msra.mxu0 0.0
      %311 = vmatprep.subr.mxu0 0.0
      %312 = vmatpush2.msra.mxu0 0.0
      %313 = vmatprep.subr.mxu0 0.0
      %314 = vmatpush2.msra.mxu0 0.0
      %315 = vmatprep.subr.mxu0 0.0
      %316 = vmatpush2.msra.mxu0 0.0
      %317 = vmatprep.subr.mxu0 0.0
      %318 = vmatpush2.msra.mxu0 0.0
      %319 = vmatprep.subr.mxu0 0.0
      %320 = vmatpush2.msra.mxu0 0.0
      %321 = vmatprep.subr.mxu0 0.0
      %322 = vmatpush2.msra.mxu0 %v261
      %323 = vmatprep.subr.mxu0 0.0
      %324 = vmatpush2.msra.mxu0 %v180
      %325 = vmatprep.subr.mxu0 0.0
      %326 = vmatpush2.msra.mxu0 %v179
      %327 = vmatprep.mubr.f32.mxu0 %v248
      %328 = vmatmul.mubr.f32.gmra.mxu0 %v198
      %v329 = vpop.f32.mrf.mxu0
      %v330 = vadd.f32 0.0, %v329
      %v331 = vpop.f32.mrf.mxu0
      %332 = vmatprep.mubr.f32.mxu0 %v251
      %333 = vmatmul.mubr.f32.gmra.mxu0 %v199
      %v334 = vpop.f32.mrf.mxu0
      %v335 = vadd.f32 0.0, %v334
      %v336 = vpop.f32.mrf.mxu0
      %337 = vmatprep.mubr.f32.mxu0 %v254
      %338 = vmatmul.mubr.f32.gmra.mxu0 %v200
      %v339 = vpop.f32.mrf.mxu0
      %v340 = vadd.f32 0.0, %v339
      %v341 = vpop.f32.mrf.mxu0
      %342 = vmatprep.mubr.f32.mxu0 %v257
      %343 = vmatmul.mubr.f32.gmra.mxu0 %v201
      %v344 = vpop.f32.mrf.mxu0
      %v345 = vadd.f32 0.0, %v344
      %v346 = vpop.f32.mrf.mxu0
      %347 = vdwg.mxu0
      %vm348 = vcmp.gt.f32.partialorder %v330, 0.0
      %vm349 = vcmp.gt.f32.partialorder %v335, 0.0
      %vm350 = vcmp.gt.f32.partialorder %v340, 0.0
      %vm351 = vcmp.gt.f32.partialorder %v345, 0.0
      %v352 = vmul.f32 %v330, 1.06
      %v353 = vmul.f32 %v335, 1.06
      %v354 = vmul.f32 %v340, 1.06
      %v355 = vmul.f32 %v345, 1.06
      %v356 = vsel %vm348, %v330, %v352
      %v357 = vsel %vm349, %v335, %v353
      %v358 = vsel %vm350, %v340, %v354
      %v359 = vsel %vm351, %v345, %v355
      %vm360 = vcmask 785408
      %361 = vst.msk [vmem:[%s143] sm:$0xff] %vm360, %v356
      %362 = vst.msk [vmem:[%s143 + $0x8] sm:$0xff] %vm360, %v357
      %363 = vst.msk [vmem:[%s143 + $0x10] sm:$0xff] %vm360, %v358
      %vm364 = vcmask 782336
      %365 = vst.msk [vmem:[%s143 + $0x18] sm:$0x1f] %vm364, %v359
      %p366 = scmp.lt.s32.totalorder %s13, 1
      %s367 = scalar_select %p366, %s13, 1
      %s368 = smul.addr %s367, 4
      %s369 = smul.addr %s368, 8
      %s370 = scalar_lea.vmem %s2, %s369
      // Predicated region
      $region29: #{tpu_custom_call.1} parent=27 // pred_check
        %p371 = pneg %p78
      $region30: #{tpu_custom_call.1} parent=27 // pred_check_branch
        %373 = sbr.rel (%p371) target = $region32
      $region31: #{tpu_custom_call.1} parent=27 // pred_region
        _
      $region32: #{tpu_custom_call.1} parent=27 // pred_fallthru
        _
    $region28: #{tpu_custom_call.1} parent=5 // pred_fallthru
      _
    %p374 = scmp.le.s32.totalorder 2, %s8
    // Predicated region
    $region33: #{tpu_custom_call.1} parent=5 // pred_check
      %p375 = pneg %p374
    $region34: #{tpu_custom_call.1} parent=5 // pred_check_branch
      %377 = sbr.rel (%p375) target = $region36
    $region35: #{tpu_custom_call.1} parent=5 // pred_region
      %s378 = ssub.s32 %s8, 2
      // Predicated region
      $region37: #{tpu_custom_call.1} parent=35 // pred_check
        %p379 = pneg %p84
      $region38: #{tpu_custom_call.1} parent=35 // pred_check_branch
        %381 = sbr.rel (%p379) target = $region40
      $region39: #{tpu_custom_call.1} parent=35 // pred_region
        %p382 = scmp.lt.s32.totalorder %s14, 1
        %s383 = scalar_select %p382, %s14, 1
        %s384 = smul.addr %s383, 4
        %s385 = smul.addr %s384, 8
        %s386 = scalar_lea.vmem %s2, %s385
      $region40: #{tpu_custom_call.1} parent=35 // pred_fallthru
        _
    $region36: #{tpu_custom_call.1} parent=5 // pred_fallthru
      _
  $region6: #{tpu_custom_call.1} parent=0 // loop_footer
    %s12 = sadd.s32 1, %s8
  $region7: #{tpu_custom_call.1} parent=0 // loop_footer_branch
    %7 = sbr.rel target = $region3
  $region8: #{tpu_custom_call.1} parent=0 // loop_exit
    _

</llo_original>
